<compile_context>
chip_gen: v7x
topology: tpu7x:2x2x1
jax: 0.10.0
libtpu: 0.0.40
codegen_flags: <defaults>
</compile_context>

<pallas_src>
import functools

import jax
import jax.numpy as jnp
import numpy as np
from jax.experimental import pallas as pl
from jax.experimental.pallas import tpu as pltpu


def _mus_kernel(sbase_ref, vseed_ref, gate_ref, x_ref, wt_ref, b_ref, ys_ref,
                *, lam: float, q: int, tb: int, L: int):
    """One grid step = TB examples.

    Ref shapes:
      sbase_ref : (1, q)        f32   (resident)
      vseed_ref : (1, TB*L, 1)  f32
      gate_ref  : (1, TB*L, 1)  f32   (attention_mask * alpha)
      x_ref     : (1, TB*L, D)  bf16
      wt_ref    : (C, D)        bf16  (resident, W transposed)
      b_ref     : (C, 1)        f32   (resident)
      ys_ref    : (1, TB, C)    f32
    """
    C = wt_ref.shape[0]

    # One fused bf16 MXU call for the whole block (reassociated x @ W):
    #   z^T[:, b*L:(b+1)*L] = W^T @ x_b^T   ->  (C, TB*L), f32 accumulate.
    zt_all = jax.lax.dot_general(
        wt_ref[...], x_ref[0],
        dimension_numbers=(((1,), (1,)), ((), ())),
        preferred_element_type=jnp.float32)            # (C, TB*L)

    s_base = sbase_ref[...]                            # (1, q)  f32
    bias_col = b_ref[...]                              # (C, 1)  f32
    vs_all = vseed_ref[0]                              # (TB*L, 1)
    g_all = gate_ref[0]                                # (TB*L, 1)

    # Constants hoisted out of the per-example loop (no repeated broadcasts).
    row = jax.lax.broadcasted_iota(jnp.int32, (C, q), 0)      # class index, (C, q)
    vote_w = jnp.full((1, q), 1.0 / q, dtype=jnp.float32)     # mean-over-q weights

    rows = []
    for i in range(tb):                                # static, small unrolled loop
        lo = i * L
        vseed = vs_all[lo:lo + L, :]                   # (L, 1) f32
        gate = g_all[lo:lo + L, :]                     # (L, 1) f32

        # Discretized MuS masks, q on the LANE axis: t, mus, am are (L, q).
        # Mask math stays f32 so the lattice comparison matches the reference.
        t = jnp.mod(vseed + s_base, 1.0)
        mus = (t < lam).astype(jnp.float32)
        am = gate * mus                                # attn * alpha * mask

        denom = jnp.maximum(jnp.sum(am, axis=0, keepdims=True), 1.0)   # (1, q)

        # scores = denom * logits  (same argmax; division dropped on purpose):
        #   logits^T = (z_b^T @ am) / denom + bias
        zt = zt_all[:, lo:lo + L]                      # (C, L) f32
        scores = jnp.dot(zt, am, preferred_element_type=jnp.float32)   # (C, q)
        scores = scores + bias_col * denom             # (C, q)

        # one_hot(argmax over classes), first-occurrence tie-break, lane-dense.
        rmax = jnp.max(scores, axis=0, keepdims=True)  # (1, q)
        cand = jnp.where(scores >= rmax, row, C)
        amin = jnp.min(cand, axis=0, keepdims=True)    # (1, q)
        onehot = (row == amin).astype(jnp.float32)     # (C, q)

        # mean vote over q, returned directly as a (1, C) row via an MXU
        # contraction (avoids a sublane<->lane relayout of the tiny result).
        rows.append(jax.lax.dot_general(
            vote_w, onehot, dimension_numbers=(((1,), (1,)), ((), ())),
            preferred_element_type=jnp.float32))       # (1, C)

    ys_ref[0] = jnp.concatenate(rows, axis=0)          # single (TB, C) store


def certified_mus_forward(inputs_embeds, attention_mask, alpha, v_seed,
                          w, bias, *, lam: float, q: int, tb: int | None = None):
    bsz, L, D = inputs_embeds.shape
    C = w.shape[1]
    lam = int(lam * q) / q                     # quantize lambda as in the module

    if tb is None:
        tb = bsz if bsz <= 8 else 8            # examples per grid step
    assert bsz % tb == 0, "tb must divide the batch size"
    G = bsz // tb

    # Layout prep (cheap XLA ops, done once):
    #  - x and W stay bf16 (HBM bytes / VMEM halved; MXU is bf16-native).
    #  - attention_mask * alpha pre-multiplied into one f32 gate array.
    #  - per-example vectors stored with length-1 lane dim so the kernel can
    #    build (L, q) lane-dense masks without in-kernel transposes.
    x3 = inputs_embeds.astype(jnp.bfloat16).reshape(G, tb * L, D)
    gate3 = (attention_mask.astype(jnp.float32)
             * alpha.astype(jnp.float32)).reshape(G, tb * L, 1)
    vseed3 = v_seed.astype(jnp.float32).reshape(G, tb * L, 1)
    wt = w.astype(jnp.bfloat16).T                              # (C, D)
    bias_col = bias.astype(jnp.float32).reshape(C, 1)          # (C, 1)
    s_base = ((jnp.arange(q, dtype=jnp.float32) + 0.5) / q).reshape(1, q)

    kernel = functools.partial(_mus_kernel, lam=lam, q=q, tb=tb, L=L)

    # NOTE: at realistic L/D (e.g. L>=512, D>=2048), tile D in the x BlockSpec
    # and set pltpu.CompilerParams(vmem_limit_bytes=...) for v7x's 64 MiB VMEM.
    grid_spec = pltpu.PrefetchScalarGridSpec(
        num_scalar_prefetch=0,
        grid=(G,),
        in_specs=[
            pl.BlockSpec((1, q), lambda g: (0, 0)),            # s_base (resident)
            pl.BlockSpec((1, tb * L, 1), lambda g: (g, 0, 0)),  # v_seed
            pl.BlockSpec((1, tb * L, 1), lambda g: (g, 0, 0)),  # gate = attn*alpha
            pl.BlockSpec((1, tb * L, D), lambda g: (g, 0, 0)),  # inputs_embeds bf16
            pl.BlockSpec((C, D), lambda g: (0, 0)),             # W^T bf16 (resident)
            pl.BlockSpec((C, 1), lambda g: (0, 0)),             # bias (resident)
        ],
        out_specs=pl.BlockSpec((1, tb, C), lambda g: (g, 0, 0)),  # per-step block
    )

    ys = pl.pallas_call(
        kernel,
        out_shape=jax.ShapeDtypeStruct((G, tb, C), jnp.float32),
        grid_spec=grid_spec,
        compiler_params=pltpu.CompilerParams(
            dimension_semantics=("parallel",)),   # batch axis is independent
    )(s_base, vseed3, gate3, x3, wt, bias_col)

    all_ys = ys.reshape(bsz, C)

    # cert radius in plain JAX (O(B*C) scalar work; no narrow in-kernel stores).
    top2 = jax.lax.top_k(all_ys, 2)[0]
    cert_rs = (top2[:, 0] - top2[:, 1]) / (2.0 * lam)
    return {"logits": all_ys, "cert_rs": cert_rs}


def _reference(inputs_embeds, attention_mask, alpha, v_seed, w, bias, lam, q):
    """Pure-JAX reference mirroring the PyTorch forward (f32 math)."""
    x = inputs_embeds.astype(jnp.float32)
    wf = w.astype(jnp.float32)
    bsz, L, D = x.shape
    C = wf.shape[1]
    lam = int(lam * q) / q
    s_base = (jnp.arange(q, dtype=jnp.float32) + 0.5) / q
    ys, certs = [], []
    for bi in range(bsz):
        t = jnp.mod(v_seed[bi][None, :] + s_base[:, None], 1.0)     # (q, L)
        mus = (t < lam).astype(jnp.float32)
        am = (attention_mask[bi].astype(jnp.float32)[None, :]
              * alpha[bi].astype(jnp.float32)[None, :] * mus)
        pooled = am @ x[bi]
        pooled = pooled / jnp.maximum(am.sum(-1, keepdims=True), 1.0)
        logits = pooled @ wf + bias
        oh = jax.nn.one_hot(jnp.argmax(logits, axis=-1), C)
        avg = oh.mean(0)
        srt = jnp.sort(avg)[::-1]
        ys.append(avg)
        certs.append((srt[0] - srt[1]) / (2.0 * lam))
    return jnp.stack(ys), jnp.stack(certs)


if __name__ == "__main__":
    # Small, module-consistent shapes: grid of 2 steps, TB=2 examples per step.
    BSZ, L, D, C, Q = 4, 8, 32, 4, 64
    TB = 2
    LAMBDA = int(0.25 * Q) / Q   # lambda_ quantized exactly as in the module

    key = jax.random.PRNGKey(0)
    k_x, k_w, k_b, k_seed = jax.random.split(key, 4)

    # Inputs / weights live in bf16 (what the kernel consumes); the reference
    # upcasts the same bf16 values so both paths see identical data.
    inputs_embeds = jax.random.normal(k_x, (BSZ, L, D),
                                      dtype=jnp.float32).astype(jnp.bfloat16)
    attention_mask = jnp.ones((BSZ, L), dtype=jnp.int32)
    alpha = jnp.ones((BSZ, L), dtype=jnp.int32)

    # Deterministic base-classifier parameters (masked-mean-pool + linear head).
    w = (0.1 * jax.random.normal(k_w, (D, C), dtype=jnp.float32)).astype(jnp.bfloat16)
    bias = 0.01 * jax.random.normal(k_b, (C,), dtype=jnp.float32)

    # v_seed = randint(0, q, (1, L)) / q per example (the PyTorch module draws
    # it inside the per-example loop); kept in f32 so mask boundaries are exact.
    v_seed = jax.random.randint(k_seed, (BSZ, L), 0, Q).astype(jnp.float32) / Q

    out = certified_mus_forward(inputs_embeds, attention_mask, alpha, v_seed,
                                w, bias, lam=LAMBDA, q=Q, tb=TB)
    jax.block_until_ready(out["logits"])
    jax.block_until_ready(out["cert_rs"])

    ref_ys, ref_certs = _reference(inputs_embeds, attention_mask, alpha,
                                   v_seed, w, bias, LAMBDA, Q)
    np.testing.assert_allclose(np.asarray(out["logits"]), np.asarray(ref_ys),
                               rtol=1e-5, atol=1e-5)
    np.testing.assert_allclose(np.asarray(out["cert_rs"]), np.asarray(ref_certs),
                               rtol=1e-5, atol=1e-5)

    print("KERNEL_OK")
</pallas_src>

<mosaic_0001>
module attributes {stable_mosaic.version = 11 : i64} {
  func.func @_mus_kernel(%arg0: i32, %arg1: memref<1x64xf32, #tpu.memory_space<vmem>>, %arg2: memref<1x16x1xf32, #tpu.memory_space<vmem>>, %arg3: memref<1x16x1xf32, #tpu.memory_space<vmem>>, %arg4: memref<1x16x32xbf16, #tpu.memory_space<vmem>>, %arg5: memref<4x32xbf16, #tpu.memory_space<vmem>>, %arg6: memref<4x1xf32, #tpu.memory_space<vmem>>, %arg7: memref<1x2x4xf32, #tpu.memory_space<vmem>>) attributes {dimension_semantics = [#tpu.dimension_semantics<parallel>], iteration_bounds = array<i64: 2>, scalar_prefetch = 0 : i64, scratch_operands = 0 : i64, tpu.core_type = #tpu.core_type<tc>, window_params = [{pipeline_mode = #tpu.pipeline_mode<synchronous>, transform_indices = @transform_0, window_bounds = array<i64: 1, 64>}, {transform_indices = @transform_1, window_bounds = array<i64: 1, 16, 1>}, {transform_indices = @transform_2, window_bounds = array<i64: 1, 16, 1>}, {transform_indices = @transform_3, window_bounds = array<i64: 1, 16, 32>}, {pipeline_mode = #tpu.pipeline_mode<synchronous>, transform_indices = @transform_4, window_bounds = array<i64: 4, 32>}, {pipeline_mode = #tpu.pipeline_mode<synchronous>, transform_indices = @transform_5, window_bounds = array<i64: 4, 1>}, {transform_indices = @transform_6, window_bounds = array<i64: 1, 2, 4>}]} {
    %c0 = arith.constant 0 : index
    %c0_0 = arith.constant 0 : index
    %0 = vector.load %arg5[%c0, %c0_0] : memref<4x32xbf16, #tpu.memory_space<vmem>>, vector<4x32xbf16>
    %c0_1 = arith.constant 0 : index
    %c0_2 = arith.constant 0 : index
    %c0_3 = arith.constant 0 : index
    %1 = vector.load %arg4[%c0_1, %c0_2, %c0_3] : memref<1x16x32xbf16, #tpu.memory_space<vmem>>, vector<1x16x32xbf16>
    %2 = vector.shape_cast %1 : vector<1x16x32xbf16> to vector<16x32xbf16>
    %cst = arith.constant dense<0.000000e+00> : vector<4x16xf32>
    %3 = tpu.matmul %0, %2, %cst {dimension_numbers = #tpu.dot_dimension_numbers<[1], [1], [0], [0], [0, 0, 1, 0], [], []>} : vector<4x32xbf16>, vector<16x32xbf16>, vector<4x16xf32> -> vector<4x16xf32>
    %c0_4 = arith.constant 0 : index
    %c0_5 = arith.constant 0 : index
    %4 = vector.load %arg1[%c0_4, %c0_5] : memref<1x64xf32, #tpu.memory_space<vmem>>, vector<1x64xf32>
    %c0_6 = arith.constant 0 : index
    %c0_7 = arith.constant 0 : index
    %5 = vector.load %arg6[%c0_6, %c0_7] : memref<4x1xf32, #tpu.memory_space<vmem>>, vector<4x1xf32>
    %c0_8 = arith.constant 0 : index
    %c0_9 = arith.constant 0 : index
    %c0_10 = arith.constant 0 : index
    %6 = vector.load %arg2[%c0_8, %c0_9, %c0_10] : memref<1x16x1xf32, #tpu.memory_space<vmem>>, vector<1x16x1xf32>
    %7 = vector.shape_cast %6 : vector<1x16x1xf32> to vector<16x1xf32>
    %c0_11 = arith.constant 0 : index
    %c0_12 = arith.constant 0 : index
    %c0_13 = arith.constant 0 : index
    %8 = vector.load %arg3[%c0_11, %c0_12, %c0_13] : memref<1x16x1xf32, #tpu.memory_space<vmem>>, vector<1x16x1xf32>
    %9 = vector.shape_cast %8 : vector<1x16x1xf32> to vector<16x1xf32>
    %10 = tpu.iota {dimensions = array<i32: 0>} : vector<4x64xi32>
    %cst_14 = arith.constant 1.562500e-02 : f32
    %11 = vector.broadcast %cst_14 : f32 to vector<1x64xf32>
    %12 = vector.extract_strided_slice %7 {offsets = [0, 0], sizes = [8, 1], strides = [1, 1]} : vector<16x1xf32> to vector<8x1xf32>
    %13 = vector.extract_strided_slice %9 {offsets = [0, 0], sizes = [8, 1], strides = [1, 1]} : vector<16x1xf32> to vector<8x1xf32>
    %14 = vector.broadcast %12 : vector<8x1xf32> to vector<8x64xf32>
    %15 = vector.broadcast %4 : vector<1x64xf32> to vector<8x64xf32>
    %16 = arith.addf %14, %15 : vector<8x64xf32>
    %cst_15 = arith.constant 1.000000e+00 : f32
    %17 = vector.broadcast %cst_15 : f32 to vector<8x64xf32>
    %18 = arith.remf %16, %17 : vector<8x64xf32>
    %cst_16 = arith.constant 0.000000e+00 : f32
    %19 = vector.broadcast %cst_16 : f32 to vector<8x64xf32>
    %20 = arith.cmpf one, %18, %19 : vector<8x64xf32>
    %cst_17 = arith.constant 0.000000e+00 : f32
    %21 = vector.broadcast %cst_17 : f32 to vector<8x64xf32>
    %22 = arith.cmpf olt, %18, %21 : vector<8x64xf32>
    %cst_18 = arith.constant 0.000000e+00 : f32
    %23 = arith.cmpf olt, %cst_15, %cst_18 : f32
    %24 = vector.broadcast %23 : i1 to vector<8x64xi1>
    %25 = vector.broadcast %24 : vector<8x64xi1> to vector<8x64xi1>
    %26 = arith.xori %22, %25 : vector<8x64xi1>
    %27 = arith.andi %26, %20 : vector<8x64xi1>
    %28 = vector.broadcast %cst_15 : f32 to vector<8x64xf32>
    %29 = arith.addf %18, %28 : vector<8x64xf32>
    %30 = arith.select %27, %29, %18 : vector<8x64xi1>, vector<8x64xf32>
    %cst_19 = arith.constant 2.500000e-01 : f32
    %31 = vector.broadcast %cst_19 : f32 to vector<8x64xf32>
    %32 = arith.cmpf olt, %30, %31 : vector<8x64xf32>
    %33 = arith.extui %32 : vector<8x64xi1> to vector<8x64xi32>
    %34 = arith.sitofp %33 : vector<8x64xi32> to vector<8x64xf32>
    %35 = vector.broadcast %13 : vector<8x1xf32> to vector<8x64xf32>
    %36 = arith.mulf %35, %34 : vector<8x64xf32>
    %cst_20 = arith.constant dense<0.000000e+00> : vector<64xf32>
    %37 = vector.multi_reduction <add>, %36, %cst_20 [0] : vector<8x64xf32> to vector<64xf32>
    %38 = vector.shape_cast %37 : vector<64xf32> to vector<1x64xf32>
    %cst_21 = arith.constant 1.000000e+00 : f32
    %39 = vector.broadcast %cst_21 : f32 to vector<1x64xf32>
    %40 = arith.maximumf %38, %39 : vector<1x64xf32>
    %41 = vector.extract_strided_slice %3 {offsets = [0, 0], sizes = [4, 8], strides = [1, 1]} : vector<4x16xf32> to vector<4x8xf32>
    %cst_22 = arith.constant dense<0.000000e+00> : vector<4x64xf32>
    %42 = tpu.matmul %41, %36, %cst_22 {dimension_numbers = #tpu.dot_dimension_numbers<[1], [0], [0], [1], [0, 0, 1, 1], [], []>} : vector<4x8xf32>, vector<8x64xf32>, vector<4x64xf32> -> vector<4x64xf32>
    %43 = vector.broadcast %5 : vector<4x1xf32> to vector<4x64xf32>
    %44 = vector.broadcast %40 : vector<1x64xf32> to vector<4x64xf32>
    %45 = arith.mulf %43, %44 : vector<4x64xf32>
    %46 = arith.addf %42, %45 : vector<4x64xf32>
    %cst_23 = arith.constant dense<0xFF800000> : vector<64xf32>
    %47 = vector.multi_reduction <maximumf>, %46, %cst_23 [0] : vector<4x64xf32> to vector<64xf32>
    %48 = vector.shape_cast %47 : vector<64xf32> to vector<1x64xf32>
    %49 = vector.broadcast %48 : vector<1x64xf32> to vector<4x64xf32>
    %50 = arith.cmpf oge, %46, %49 : vector<4x64xf32>
    %c4_i32 = arith.constant 4 : i32
    %51 = vector.broadcast %c4_i32 : i32 to vector<4x64xi32>
    %52 = arith.select %50, %10, %51 : vector<4x64xi1>, vector<4x64xi32>
    %cst_24 = arith.constant dense<2147483647> : vector<64xi32>
    %53 = vector.multi_reduction <minsi>, %52, %cst_24 [0] : vector<4x64xi32> to vector<64xi32>
    %54 = vector.shape_cast %53 : vector<64xi32> to vector<1x64xi32>
    %55 = vector.broadcast %54 : vector<1x64xi32> to vector<4x64xi32>
    %56 = arith.cmpi eq, %10, %55 : vector<4x64xi32>
    %57 = arith.extui %56 : vector<4x64xi1> to vector<4x64xi32>
    %58 = arith.sitofp %57 : vector<4x64xi32> to vector<4x64xf32>
    %cst_25 = arith.constant dense<0.000000e+00> : vector<1x4xf32>
    %59 = tpu.matmul %11, %58, %cst_25 {dimension_numbers = #tpu.dot_dimension_numbers<[1], [1], [0], [0], [0, 0, 1, 0], [], []>} : vector<1x64xf32>, vector<4x64xf32>, vector<1x4xf32> -> vector<1x4xf32>
    %60 = vector.extract_strided_slice %7 {offsets = [8, 0], sizes = [8, 1], strides = [1, 1]} : vector<16x1xf32> to vector<8x1xf32>
    %61 = vector.extract_strided_slice %9 {offsets = [8, 0], sizes = [8, 1], strides = [1, 1]} : vector<16x1xf32> to vector<8x1xf32>
    %62 = vector.broadcast %60 : vector<8x1xf32> to vector<8x64xf32>
    %63 = vector.broadcast %4 : vector<1x64xf32> to vector<8x64xf32>
    %64 = arith.addf %62, %63 : vector<8x64xf32>
    %cst_26 = arith.constant 1.000000e+00 : f32
    %65 = vector.broadcast %cst_26 : f32 to vector<8x64xf32>
    %66 = arith.remf %64, %65 : vector<8x64xf32>
    %cst_27 = arith.constant 0.000000e+00 : f32
    %67 = vector.broadcast %cst_27 : f32 to vector<8x64xf32>
    %68 = arith.cmpf one, %66, %67 : vector<8x64xf32>
    %cst_28 = arith.constant 0.000000e+00 : f32
    %69 = vector.broadcast %cst_28 : f32 to vector<8x64xf32>
    %70 = arith.cmpf olt, %66, %69 : vector<8x64xf32>
    %cst_29 = arith.constant 0.000000e+00 : f32
    %71 = arith.cmpf olt, %cst_26, %cst_29 : f32
    %72 = vector.broadcast %71 : i1 to vector<8x64xi1>
    %73 = vector.broadcast %72 : vector<8x64xi1> to vector<8x64xi1>
    %74 = arith.xori %70, %73 : vector<8x64xi1>
    %75 = arith.andi %74, %68 : vector<8x64xi1>
    %76 = vector.broadcast %cst_26 : f32 to vector<8x64xf32>
    %77 = arith.addf %66, %76 : vector<8x64xf32>
    %78 = arith.select %75, %77, %66 : vector<8x64xi1>, vector<8x64xf32>
    %cst_30 = arith.constant 2.500000e-01 : f32
    %79 = vector.broadcast %cst_30 : f32 to vector<8x64xf32>
    %80 = arith.cmpf olt, %78, %79 : vector<8x64xf32>
    %81 = arith.extui %80 : vector<8x64xi1> to vector<8x64xi32>
    %82 = arith.sitofp %81 : vector<8x64xi32> to vector<8x64xf32>
    %83 = vector.broadcast %61 : vector<8x1xf32> to vector<8x64xf32>
    %84 = arith.mulf %83, %82 : vector<8x64xf32>
    %cst_31 = arith.constant dense<0.000000e+00> : vector<64xf32>
    %85 = vector.multi_reduction <add>, %84, %cst_31 [0] : vector<8x64xf32> to vector<64xf32>
    %86 = vector.shape_cast %85 : vector<64xf32> to vector<1x64xf32>
    %cst_32 = arith.constant 1.000000e+00 : f32
    %87 = vector.broadcast %cst_32 : f32 to vector<1x64xf32>
    %88 = arith.maximumf %86, %87 : vector<1x64xf32>
    %89 = vector.extract_strided_slice %3 {offsets = [0, 8], sizes = [4, 8], strides = [1, 1]} : vector<4x16xf32> to vector<4x8xf32>
    %cst_33 = arith.constant dense<0.000000e+00> : vector<4x64xf32>
    %90 = tpu.matmul %89, %84, %cst_33 {dimension_numbers = #tpu.dot_dimension_numbers<[1], [0], [0], [1], [0, 0, 1, 1], [], []>} : vector<4x8xf32>, vector<8x64xf32>, vector<4x64xf32> -> vector<4x64xf32>
    %91 = vector.broadcast %5 : vector<4x1xf32> to vector<4x64xf32>
    %92 = vector.broadcast %88 : vector<1x64xf32> to vector<4x64xf32>
    %93 = arith.mulf %91, %92 : vector<4x64xf32>
    %94 = arith.addf %90, %93 : vector<4x64xf32>
    %cst_34 = arith.constant dense<0xFF800000> : vector<64xf32>
    %95 = vector.multi_reduction <maximumf>, %94, %cst_34 [0] : vector<4x64xf32> to vector<64xf32>
    %96 = vector.shape_cast %95 : vector<64xf32> to vector<1x64xf32>
    %97 = vector.broadcast %96 : vector<1x64xf32> to vector<4x64xf32>
    %98 = arith.cmpf oge, %94, %97 : vector<4x64xf32>
    %c4_i32_35 = arith.constant 4 : i32
    %99 = vector.broadcast %c4_i32_35 : i32 to vector<4x64xi32>
    %100 = arith.select %98, %10, %99 : vector<4x64xi1>, vector<4x64xi32>
    %cst_36 = arith.constant dense<2147483647> : vector<64xi32>
    %101 = vector.multi_reduction <minsi>, %100, %cst_36 [0] : vector<4x64xi32> to vector<64xi32>
    %102 = vector.shape_cast %101 : vector<64xi32> to vector<1x64xi32>
    %103 = vector.broadcast %102 : vector<1x64xi32> to vector<4x64xi32>
    %104 = arith.cmpi eq, %10, %103 : vector<4x64xi32>
    %105 = arith.extui %104 : vector<4x64xi1> to vector<4x64xi32>
    %106 = arith.sitofp %105 : vector<4x64xi32> to vector<4x64xf32>
    %cst_37 = arith.constant dense<0.000000e+00> : vector<1x4xf32>
    %107 = tpu.matmul %11, %106, %cst_37 {dimension_numbers = #tpu.dot_dimension_numbers<[1], [1], [0], [0], [0, 0, 1, 0], [], []>} : vector<1x64xf32>, vector<4x64xf32>, vector<1x4xf32> -> vector<1x4xf32>
    %108 = tpu.concatenate %59, %107 in 0 : vector<1x4xf32>, vector<1x4xf32> -> vector<2x4xf32>
    %c0_38 = arith.constant 0 : index
    %c0_39 = arith.constant 0 : index
    %c0_40 = arith.constant 0 : index
    %109 = vector.load %arg7[%c0_38, %c0_39, %c0_40] : memref<1x2x4xf32, #tpu.memory_space<vmem>>, vector<1x2x4xf32>
    %110 = vector.shape_cast %109 : vector<1x2x4xf32> to vector<2x4xf32>
    %111 = vector.shape_cast %108 : vector<2x4xf32> to vector<1x2x4xf32>
    tpu.vector_store %arg7[%c0_38, %c0_39, %c0_40], %111 {strides = array<i32>} : memref<1x2x4xf32, #tpu.memory_space<vmem>>, vector<1x2x4xf32>,
    return
  }
  func.func @transform_0(%arg0: i32) -> (i32, i32) {
    %c0_i32 = arith.constant 0 : i32
    %c0_i32_0 = arith.constant 0 : i32
    %c0_i32_1 = arith.constant 0 : i32
    return %c0_i32, %c0_i32_0 : i32, i32
  }
  func.func @transform_1(%arg0: i32) -> (i32, i32, i32) {
    %c0_i32 = arith.constant 0 : i32
    %c0_i32_0 = arith.constant 0 : i32
    %c0_i32_1 = arith.constant 0 : i32
    return %arg0, %c0_i32, %c0_i32_0 : i32, i32, i32
  }
  func.func @transform_2(%arg0: i32) -> (i32, i32, i32) {
    %c0_i32 = arith.constant 0 : i32
    %c0_i32_0 = arith.constant 0 : i32
    %c0_i32_1 = arith.constant 0 : i32
    return %arg0, %c0_i32, %c0_i32_0 : i32, i32, i32
  }
  func.func @transform_3(%arg0: i32) -> (i32, i32, i32) {
    %c0_i32 = arith.constant 0 : i32
    %c0_i32_0 = arith.constant 0 : i32
    %c0_i32_1 = arith.constant 0 : i32
    return %arg0, %c0_i32, %c0_i32_0 : i32, i32, i32
  }
  func.func @transform_4(%arg0: i32) -> (i32, i32) {
    %c0_i32 = arith.constant 0 : i32
    %c0_i32_0 = arith.constant 0 : i32
    %c0_i32_1 = arith.constant 0 : i32
    return %c0_i32, %c0_i32_0 : i32, i32
  }
  func.func @transform_5(%arg0: i32) -> (i32, i32) {
    %c0_i32 = arith.constant 0 : i32
    %c0_i32_0 = arith.constant 0 : i32
    %c0_i32_1 = arith.constant 0 : i32
    return %c0_i32, %c0_i32_0 : i32, i32
  }
  func.func @transform_6(%arg0: i32) -> (i32, i32, i32) {
    %c0_i32 = arith.constant 0 : i32
    %c0_i32_0 = arith.constant 0 : i32
    %c0_i32_1 = arith.constant 0 : i32
    return %arg0, %c0_i32, %c0_i32_0 : i32, i32, i32
  }
}

</mosaic_0001>

<llo_original>
// kernel: tpu_custom_call.1
$region0: #{tpu_custom_call.1}
  #allocation0 [shape = 'u32[]', space=smem, size = 0x4, offset = 0x4, fixed_abs, tag = 'smem constant byte address 0x4 - core index']
  #allocation1 [shape = 'u32[144,128]{1,0:T(1,128)}', space=vmem, size = 0x12000, scoped, tag = 'internal scratch']
  %s0 = inlined_call_operand.vmem [shape: f32[1,64], index: 0, kind: input, shape index: {}]
  %s1 = inlined_call_operand.vmem [shape: f32[2,16,1], index: 1, kind: input, shape index: {}]
  %s2 = inlined_call_operand.vmem [shape: f32[2,16,1], index: 2, kind: input, shape index: {}]
  %s3 = inlined_call_operand.vmem [shape: bf16[2,16,32], index: 3, kind: input, shape index: {}]
  %s4 = inlined_call_operand.vmem [shape: bf16[4,32], index: 4, kind: input, shape index: {}]
  %s5 = inlined_call_operand.vmem [shape: f32[4,1], index: 5, kind: input, shape index: {}]
  %s6 = inlined_call_operand.hbm [shape: f32[2,2,4], index: 6, kind: output, shape index: {}]
  %s7 = sld [smem:[#allocation0]]
  $region57: #{tpu_custom_call.1} parent=0
    _
  %s9 = ssub.s32 1, %s7
  %s10 = scalar_select 0, %s9, %s7
  $region1: #{tpu_custom_call.1} parent=0
    #allocation2 [shape = 'u8[2048]{0}', space=vmem, size = 0x800, scoped, tag = 'output window, operand 0']
    #allocation3 [shape = 's32[2]{0}', space=sflag, size = 0x8, scoped, tag = 'scoped memory for tpu_custom_call.1']
    %11 = vsyncpa [#allocation3], 0
    %s12 = scalar_lea.sflag [#allocation3], 1
    %13 = vsyncpa %s12, 0
    loop: start=0, step=1, limit=4
    $region2: #{tpu_custom_call.1} parent=1 // loop_pre_header
      _
    $region3: #{tpu_custom_call.1} parent=1 // loop_header
      %s15 = sphi 0, %s19
      %p16 = scmp.ge.s32.totalorder %s15, 4
      %s23 = sphi 0, %s23
      %s25 = sphi 0, %s23
      %s26 = sphi 0, %s25
      %s40 = sphi 0, %s26
      %s46 = sphi 0, %s48
      %s49 = sphi 0, %s46
      %s50 = sphi 0, %s49
      %s66 = sphi 0, %s50
      %s72 = sphi 0, %s74
      %s75 = sphi 0, %s72
      %s76 = sphi 0, %s75
      %s92 = sphi 0, %s76
      %s98 = sphi 0, %s100
      %s101 = sphi 0, %s98
      %s102 = sphi 0, %s101
      %s118 = sphi 0, %s102
      %s122 = sphi 0, %s122
      %s124 = sphi 0, %s122
      %s125 = sphi 0, %s124
      %s139 = sphi 0, %s125
      %s143 = sphi 0, %s143
      %s145 = sphi 0, %s143
      %s146 = sphi 0, %s145
      %s160 = sphi 0, %s146
      %s166 = sphi 0, %s168
      %s169 = sphi 0, %s166
      %s170 = sphi 0, %s169
      %s186 = sphi 0, %s170
    $region4: #{tpu_custom_call.1} parent=1 // loop_header_branch
      %18 = sbr.rel (%p16) target = $region8
    $region5: #{tpu_custom_call.1} parent=1 // loop_body
      %s20 = ssub.s32 %s15, 1
      %s21 = ssub.s32 %s15, 2
      %s22 = sadd.s32 %s15, 1
      %s24 = sadd.s32 %s23, 1
      %p27 = scmp.eq.s32.totalorder %s15, 1
      %p28 = scmp.ne.s32.totalorder %s23, %s25
      %p29 = scmp.eq.s32.totalorder %s15, 0
      %p30 = por %p28, %p29
      %p31 = scmp.ne.s32.totalorder %s23, %s25
      %p32 = scmp.eq.s32.totalorder %s20, 1
      %p33 = por %p31, %p32
      %p34 = scmp.ne.s32.totalorder %s25, %s26
      %p35 = scmp.eq.s32.totalorder %s20, 0
      %p36 = por %p34, %p35
      %p37 = scmp.ne.s32.totalorder %s25, %s26
      %p38 = scmp.eq.s32.totalorder %s21, 1
      %p39 = por %p37, %p38
      %p41 = scmp.ne.s32.totalorder %s26, %s40
      %p42 = scmp.eq.s32.totalorder %s21, 0
      %p43 = por %p41, %p42
      %s44 = ssub.s32 %s15, %s22
      %p45 = scmp.eq.s32.totalorder %s44, 0
      %s47 = sadd.s32 %s46, 1
      %s48 = scalar_select %p45, %s46, %s47
      %p51 = pneg %p45
      %p52 = scmp.eq.s32.totalorder %s15, 1
      %p53 = por %p51, %p52
      %p54 = scmp.ne.s32.totalorder %s46, %s49
      %p55 = scmp.eq.s32.totalorder %s15, 0
      %p56 = por %p54, %p55
      %p57 = scmp.ne.s32.totalorder %s46, %s49
      %p58 = scmp.eq.s32.totalorder %s20, 1
      %p59 = por %p57, %p58
      %p60 = scmp.ne.s32.totalorder %s49, %s50
      %p61 = scmp.eq.s32.totalorder %s20, 0
      %p62 = por %p60, %p61
      %p63 = scmp.ne.s32.totalorder %s49, %s50
      %p64 = scmp.eq.s32.totalorder %s21, 1
      %p65 = por %p63, %p64
      %p67 = scmp.ne.s32.totalorder %s50, %s66
      %p68 = scmp.eq.s32.totalorder %s21, 0
      %p69 = por %p67, %p68
      %s70 = ssub.s32 %s15, %s22
      %p71 = scmp.eq.s32.totalorder %s70, 0
      %s73 = sadd.s32 %s72, 1
      %s74 = scalar_select %p71, %s72, %s73
      %p77 = pneg %p71
      %p78 = scmp.eq.s32.totalorder %s15, 1
      %p79 = por %p77, %p78
      %p80 = scmp.ne.s32.totalorder %s72, %s75
      %p81 = scmp.eq.s32.totalorder %s15, 0
      %p82 = por %p80, %p81
      %p83 = scmp.ne.s32.totalorder %s72, %s75
      %p84 = scmp.eq.s32.totalorder %s20, 1
      %p85 = por %p83, %p84
      %p86 = scmp.ne.s32.totalorder %s75, %s76
      %p87 = scmp.eq.s32.totalorder %s20, 0
      %p88 = por %p86, %p87
      %p89 = scmp.ne.s32.totalorder %s75, %s76
      %p90 = scmp.eq.s32.totalorder %s21, 1
      %p91 = por %p89, %p90
      %p93 = scmp.ne.s32.totalorder %s76, %s92
      %p94 = scmp.eq.s32.totalorder %s21, 0
      %p95 = por %p93, %p94
      %s96 = ssub.s32 %s15, %s22
      %p97 = scmp.eq.s32.totalorder %s96, 0
      %s99 = sadd.s32 %s98, 1
      %s100 = scalar_select %p97, %s98, %s99
      %p103 = pneg %p97
      %p104 = scmp.eq.s32.totalorder %s15, 1
      %p105 = por %p103, %p104
      %p106 = scmp.ne.s32.totalorder %s98, %s101
      %p107 = scmp.eq.s32.totalorder %s15, 0
      %p108 = por %p106, %p107
      %p109 = scmp.ne.s32.totalorder %s98, %s101
      %p110 = scmp.eq.s32.totalorder %s20, 1
      %p111 = por %p109, %p110
      %p112 = scmp.ne.s32.totalorder %s101, %s102
      %p113 = scmp.eq.s32.totalorder %s20, 0
      %p114 = por %p112, %p113
      %p115 = scmp.ne.s32.totalorder %s101, %s102
      %p116 = scmp.eq.s32.totalorder %s21, 1
      %p117 = por %p115, %p116
      %p119 = scmp.ne.s32.totalorder %s102, %s118
      %p120 = scmp.eq.s32.totalorder %s21, 0
      %p121 = por %p119, %p120
      %s123 = sadd.s32 %s122, 1
      %p126 = scmp.eq.s32.totalorder %s15, 1
      %p127 = scmp.ne.s32.totalorder %s122, %s124
      %p128 = scmp.eq.s32.totalorder %s15, 0
      %p129 = por %p127, %p128
      %p130 = scmp.ne.s32.totalorder %s122, %s124
      %p131 = scmp.eq.s32.totalorder %s20, 1
      %p132 = por %p130, %p131
      %p133 = scmp.ne.s32.totalorder %s124, %s125
      %p134 = scmp.eq.s32.totalorder %s20, 0
      %p135 = por %p133, %p134
      %p136 = scmp.ne.s32.totalorder %s124, %s125
      %p137 = scmp.eq.s32.totalorder %s21, 1
      %p138 = por %p136, %p137
      %p140 = scmp.ne.s32.totalorder %s125, %s139
      %p141 = scmp.eq.s32.totalorder %s21, 0
      %p142 = por %p140, %p141
      %s144 = sadd.s32 %s143, 1
      %p147 = scmp.eq.s32.totalorder %s15, 1
      %p148 = scmp.ne.s32.totalorder %s143, %s145
      %p149 = scmp.eq.s32.totalorder %s15, 0
      %p150 = por %p148, %p149
      %p151 = scmp.ne.s32.totalorder %s143, %s145
      %p152 = scmp.eq.s32.totalorder %s20, 1
      %p153 = por %p151, %p152
      %p154 = scmp.ne.s32.totalorder %s145, %s146
      %p155 = scmp.eq.s32.totalorder %s20, 0
      %p156 = por %p154, %p155
      %p157 = scmp.ne.s32.totalorder %s145, %s146
      %p158 = scmp.eq.s32.totalorder %s21, 1
      %p159 = por %p157, %p158
      %p161 = scmp.ne.s32.totalorder %s146, %s160
      %p162 = scmp.eq.s32.totalorder %s21, 0
      %p163 = por %p161, %p162
      %s164 = ssub.s32 %s15, %s22
      %p165 = scmp.eq.s32.totalorder %s164, 0
      %s167 = sadd.s32 %s166, 1
      %s168 = scalar_select %p165, %s166, %s167
      %p171 = pneg %p165
      %p172 = scmp.eq.s32.totalorder %s15, 1
      %p173 = por %p171, %p172
      %p174 = scmp.ne.s32.totalorder %s166, %s169
      %p175 = scmp.eq.s32.totalorder %s15, 0
      %p176 = por %p174, %p175
      %p177 = scmp.ne.s32.totalorder %s166, %s169
      %p178 = scmp.eq.s32.totalorder %s20, 1
      %p179 = por %p177, %p178
      %p180 = scmp.ne.s32.totalorder %s169, %s170
      %p181 = scmp.eq.s32.totalorder %s20, 0
      %p182 = por %p180, %p181
      %p183 = scmp.ne.s32.totalorder %s169, %s170
      %p184 = scmp.eq.s32.totalorder %s21, 1
      %p185 = por %p183, %p184
      %p187 = scmp.ne.s32.totalorder %s170, %s186
      %p188 = scmp.eq.s32.totalorder %s21, 0
      %p189 = por %p187, %p188
      %p190 = scmp.le.s32.totalorder 1, %s15
      %p191 = scmp.lt.s32.totalorder %s15, 3
      %p192 = pnand %p190, %p191
      %p193 = pneg %p192
      // Predicated region
      $region9: #{tpu_custom_call.1} parent=5 // pred_check
        _
      $region10: #{tpu_custom_call.1} parent=5 // pred_check_branch
        %195 = sbr.rel (%p192) target = $region12
      $region11: #{tpu_custom_call.1} parent=5 // pred_region
        %s196 = ssub.s32 %s15, 1
        // Predicated region
        $region13: #{tpu_custom_call.1} parent=11 // pred_check
          %p197 = pneg %p36
        $region14: #{tpu_custom_call.1} parent=11 // pred_check_branch
          %199 = sbr.rel (%p197) target = $region16
        $region15: #{tpu_custom_call.1} parent=11 // pred_region
          _
        $region16: #{tpu_custom_call.1} parent=11 // pred_fallthru
          _
        // Predicated region
        $region17: #{tpu_custom_call.1} parent=11 // pred_check
          %p200 = pneg %p135
        $region18: #{tpu_custom_call.1} parent=11 // pred_check_branch
          %202 = sbr.rel (%p200) target = $region20
        $region19: #{tpu_custom_call.1} parent=11 // pred_region
          _
        $region20: #{tpu_custom_call.1} parent=11 // pred_fallthru
          _
        // Predicated region
        $region21: #{tpu_custom_call.1} parent=11 // pred_check
          %p203 = pneg %p156
        $region22: #{tpu_custom_call.1} parent=11 // pred_check_branch
          %205 = sbr.rel (%p203) target = $region24
        $region23: #{tpu_custom_call.1} parent=11 // pred_region
          _
        $region24: #{tpu_custom_call.1} parent=11 // pred_fallthru
          _
      $region12: #{tpu_custom_call.1} parent=5 // pred_fallthru
        _
      %p206 = scmp.lt.s32.totalorder %s15, 2
      // Predicated region
      $region25: #{tpu_custom_call.1} parent=5 // pred_check
        %p207 = pneg %p206
      $region26: #{tpu_custom_call.1} parent=5 // pred_check_branch
        %209 = sbr.rel (%p207) target = $region28
      $region27: #{tpu_custom_call.1} parent=5 // pred_region
        // Predicated region
        $region29: #{tpu_custom_call.1} parent=27 // pred_check
          %p210 = pneg %p56
        $region30: #{tpu_custom_call.1} parent=27 // pred_check_branch
          %212 = sbr.rel (%p210) target = $region32
        $region31: #{tpu_custom_call.1} parent=27 // pred_region
          %p213 = scmp.lt.s32.totalorder %s15, 1
          %s214 = scalar_select %p213, %s15, 1
          %s215 = smul.addr %s214, 2
          %s216 = smul.addr %s215, 8
          %s217 = scalar_lea.vmem %s1, %s216
        $region32: #{tpu_custom_call.1} parent=27 // pred_fallthru
          _
        // Predicated region
        $region33: #{tpu_custom_call.1} parent=27 // pred_check
          %p218 = pneg %p82
        $region34: #{tpu_custom_call.1} parent=27 // pred_check_branch
          %220 = sbr.rel (%p218) target = $region36
        $region35: #{tpu_custom_call.1} parent=27 // pred_region
          %p221 = scmp.lt.s32.totalorder %s15, 1
          %s222 = scalar_select %p221, %s15, 1
          %s223 = smul.addr %s222, 2
          %s224 = smul.addr %s223, 8
          %s225 = scalar_lea.vmem %s2, %s224
        $region36: #{tpu_custom_call.1} parent=27 // pred_fallthru
          _
        // Predicated region
        $region37: #{tpu_custom_call.1} parent=27 // pred_check
          %p226 = pneg %p108
        $region38: #{tpu_custom_call.1} parent=27 // pred_check_branch
          %228 = sbr.rel (%p226) target = $region40
        $region39: #{tpu_custom_call.1} parent=27 // pred_region
          %p229 = scmp.lt.s32.totalorder %s15, 1
          %s230 = scalar_select %p229, %s15, 1
          %s231 = smul.addr %s230, 2
          %s232 = smul.addr %s231, 4
          %s233 = scalar_lea.vmem %s3, %s232
        $region40: #{tpu_custom_call.1} parent=27 // pred_fallthru
          _
      $region28: #{tpu_custom_call.1} parent=5 // pred_fallthru
        _
      %p234 = scmp.le.s32.totalorder 1, %s15
      %p235 = scmp.lt.s32.totalorder %s15, 3
      %p236 = pnand %p234, %p235
      %p237 = pneg %p236
      // Predicated region
      $region41: #{tpu_custom_call.1} parent=5 // pred_check
        _
      $region42: #{tpu_custom_call.1} parent=5 // pred_check_branch
        %239 = sbr.rel (%p236) target = $region44
      $region43: #{tpu_custom_call.1} parent=5 // pred_region
        %s240 = ssub.s32 %s15, 1
        %p241 = pneg %p36
        %p242 = pneg %p33
        %p243 = scmp.lt.s32.totalorder %s20, 1
        %s244 = scalar_select %p243, %s20, 1
        %s245 = smul.addr %s244, 2
        %s246 = smul.addr %s245, 8
        %s247 = scalar_lea.vmem %s1, %s246
        %p248 = pneg %p62
        %p249 = pneg %p59
        %p250 = scmp.lt.s32.totalorder %s20, 1
        %s251 = scalar_select %p250, %s20, 1
        %s252 = smul.addr %s251, 2
        %s253 = smul.addr %s252, 8
        %s254 = scalar_lea.vmem %s2, %s253
        %p255 = pneg %p88
        %p256 = pneg %p85
        %p257 = scmp.lt.s32.totalorder %s20, 1
        %s258 = scalar_select %p257, %s20, 1
        %s259 = smul.addr %s258, 2
        %s260 = smul.addr %s259, 4
        %s261 = scalar_lea.vmem %s3, %s260
        %p262 = pneg %p114
        %p263 = pneg %p111
        %p264 = pneg %p135
        %p265 = pneg %p132
        %p266 = pneg %p156
        %p267 = pneg %p153
        %p268 = pneg %p182
        %p269 = pneg %p179
        %s270 = sand.u32 %s169, 1
        %s271 = scalar_lea.sflag [#allocation3], %s270
        %s272 = sand.u32 %s169, 1
        %s273 = smul.addr %s272, 2
        %s274 = scalar_lea.vmem [#allocation2], %s273
        %p275 = scmp.lt.s32.totalorder %s20, 1
        %s276 = scalar_select %p275, %s20, 1
        %s277 = smul.addr %s276, 2
        %s278 = smul.addr %s277, 8
        %s279 = scalar_lea.vmem %s1, %s278
        %p280 = scmp.lt.s32.totalorder %s20, 1
        %s281 = scalar_select %p280, %s20, 1
        %s282 = smul.addr %s281, 2
        %s283 = smul.addr %s282, 8
        %s284 = scalar_lea.vmem %s2, %s283
        %p285 = scmp.lt.s32.totalorder %s20, 1
        %s286 = scalar_select %p285, %s20, 1
        %s287 = smul.addr %s286, 2
        %s288 = smul.addr %s287, 4
        %s289 = scalar_lea.vmem %s3, %s288
        %v291 = vld [vmem:[%s4] sm:$0x3]
        %v292 = vld [vmem:[%s289] sm:$0xf]
        %v293 = vld [vmem:[%s289 + $0x4] sm:$0xf]
        %v296 = vunpack.c.l.b16 %v292
        %v297 = vunpack.c.l.b16 %v293
        %v298 = vpack.c.b16 %v297, %v296
        %vm299 = vcmask 261120
        %v301 = vsel %vm299, %v291, 0
        %v304 = vsel %vm299, %v298, 0
        %306 = vmatprep.subr.bf16.mxu0 0
        %307 = vmatpush1.bf16.xpose.msra.mxu0 %v304
        %308 = vmatprep.subr.bf16.mxu0 0
        %309 = vmatpush1.bf16.xpose.msra.mxu0 0
        %310 = vmatprep.subr.bf16.mxu0 0
        %311 = vmatpush1.bf16.xpose.msra.mxu0 0
        %312 = vmatprep.subr.bf16.mxu0 0
        %313 = vmatpush1.bf16.xpose.msra.mxu0 0
        %314 = vmatprep.subr.bf16.mxu0 0
        %315 = vmatpush1.bf16.xpose.msra.mxu0 0
        %316 = vmatprep.subr.bf16.mxu0 0
        %317 = vmatpush1.bf16.xpose.msra.mxu0 0
        %318 = vmatprep.subr.bf16.mxu0 0
        %319 = vmatpush1.bf16.xpose.msra.mxu0 0
        %320 = vmatprep.subr.bf16.mxu0 0
        %321 = vmatpush1.bf16.xpose.msra.mxu0 0
        %322 = vmatprep.subr.bf16.mxu0 0
        %323 = vmatpush1.bf16.xpose.msra.mxu0 0
        %324 = vmatprep.subr.bf16.mxu0 0
        %325 = vmatpush1.bf16.xpose.msra.mxu0 0
        %326 = vmatprep.subr.bf16.mxu0 0
        %327 = vmatpush1.bf16.xpose.msra.mxu0 0
        %328 = vmatprep.subr.bf16.mxu0 0
        %329 = vmatpush1.bf16.xpose.msra.mxu0 0
        %330 = vmatprep.subr.bf16.mxu0 0
        %331 = vmatpush1.bf16.xpose.msra.mxu0 0
        %332 = vmatprep.subr.bf16.mxu0 0
        %333 = vmatpush1.bf16.xpose.msra.mxu0 0
        %334 = vmatprep.subr.bf16.mxu0 0
        %335 = vmatpush1.bf16.xpose.msra.mxu0 0
        %336 = vmatprep.subr.bf16.mxu0 0
        %337 = vmatpush1.bf16.xpose.msra.mxu0 0
        %338 = vmatprep.mubr.bf16.mxu0 0
        %339 = vmatmul.mubr.bf16.gmra.mrb[0].mxu0 %v301
        %v340 = vpop.f32.mrb[0].mxu0
        %v341 = vadd.f32 0.0, %v340
        %v342 = vpop.f32.mrb[0].mxu0
        %v343 = vpop.f32.mrb[0].mxu0
        %v344 = vpop.f32.mrb[0].mxu0
        %345 = vdwg.mxu0
        %v346 = vld [vmem:[%s0] sm:$0x1]
        %v347 = vld [vmem:[%s5] sm:$0xf]
        %v348 = vld [vmem:[%s279] sm:$0xff]
        %v349 = vld [vmem:[%s279 + $0x8] sm:$0xff]
        %v350 = vld [vmem:[%s284] sm:$0xff]
        %v351 = vld [vmem:[%s284 + $0x8] sm:$0xff]
        %v352 = vlaneseq
        %v353 = vshrl.u32 %v352, 7
        %355 = vset.pattern.permute.xlu0 0
        %356 = vperm.xlu0 %355, %v348
        %v357 = vpop.permute.xlu0 %356
        %v360 = vlaneseq
        %v361 = vshrl.u32 %v360, 7
        %v362 = vsub.s32 0, %v361
        %v363 = vrot.slane %v346, %v362
        %v365 = vadd.f32 %v357, %v363
        %v366 = vand.u32 2147483647, %v365
        %v367 = vrcp.pop 1.0
        %v368 = vmul.f32 %v366, %v367
        %v369 = vfloor.f32 %v368
        %v370 = vsub.f32 %v366, %v369
        %vm371 = vcmp.eq.f32.partialorder %v370, 1.0
        %v372 = vsel %vm371, 0.0, %v370
        %v373 = vand.u32 2147483647, %v372
        %v374 = vand.u32 %v365, 2147483648
        %v375 = vor.u32 %v373, %v374
        %vm376 = vcmp.ne.f32.partialorder %v375, 0.0
        %vm377 = vcmp.lt.f32.partialorder %v375, 0.0
        %vm378 = vmand %vm377, %vm376
        %v379 = vadd.f32 %v375, 1.0
        %v380 = vsel %vm378, %v379, %v375
        %vm381 = vcmp.lt.f32.partialorder %v380, 0.25
        %v382 = vsel %vm381, 1, 0
        %v383 = vcvt.s32.f32 %v382
        %385 = vset.pattern.permute.xlu0 0
        %386 = vperm.xlu0 %385, %v350
        %v387 = vpop.permute.xlu0 %386
        %v389 = vmul.f32 %v387, %v383
        %vm390 = vcmask 523264
        %v391 = vsel %vm390, %v389, 0.0
        %v392 = vrot.slane %v391, 4
        %v393 = vadd.f32 %v391, %v392
        %v394 = vrot.slane %v393, 2
        %v395 = vadd.f32 %v393, %v394
        %v396 = vrot.slane %v395, 1
        %v397 = vadd.f32 %v395, %v396
        %v398 = vmax.f32 %v397, 1.0
        %400 = vset.pattern.permute.xlu0 0
        %401 = vperm.xlu0 %400, %v347
        %v402 = vpop.permute.xlu0 %401
        %v404 = vmul.f32 %v402, %v398
        %vm405 = vcmask 64512
        %v407 = vsel %vm405, %v341, 0
        %409 = vmatprep.subr.mxu0 0.0
        %410 = vmatpush1.msra.mxu0 %v389
        %411 = vmatprep.subr.mxu0 0.0
        %412 = vmatpush1.msra.mxu0 0.0
        %413 = vmatprep.subr.mxu0 0.0
        %414 = vmatpush1.msra.mxu0 0.0
        %415 = vmatprep.subr.mxu0 0.0
        %416 = vmatpush1.msra.mxu0 0.0
        %417 = vmatprep.subr.mxu0 0.0
        %418 = vmatpush1.msra.mxu0 0.0
        %419 = vmatprep.subr.mxu0 0.0
        %420 = vmatpush1.msra.mxu0 0.0
        %421 = vmatprep.subr.mxu0 0.0
        %422 = vmatpush1.msra.mxu0 0.0
        %423 = vmatprep.subr.mxu0 0.0
        %424 = vmatpush1.msra.mxu0 0.0
        %425 = vmatprep.subr.mxu0 0.0
        %426 = vmatpush1.msra.mxu0 0.0
        %427 = vmatprep.subr.mxu0 0.0
        %428 = vmatpush1.msra.mxu0 0.0
        %429 = vmatprep.subr.mxu0 0.0
        %430 = vmatpush1.msra.mxu0 0.0
        %431 = vmatprep.subr.mxu0 0.0
        %432 = vmatpush1.msra.mxu0 0.0
        %433 = vmatprep.subr.mxu0 0.0
        %434 = vmatpush1.msra.mxu0 0.0
        %435 = vmatprep.subr.mxu0 0.0
        %436 = vmatpush1.msra.mxu0 0.0
        %437 = vmatprep.subr.mxu0 0.0
        %438 = vmatpush1.msra.mxu0 0.0
        %439 = vmatprep.subr.mxu0 0.0
        %440 = vmatpush1.msra.mxu0 0.0
        %441 = vmatprep.subr.mxu0 0.0
        %442 = vmatpush1.msra.mxu0 0.0
        %443 = vmatprep.subr.mxu0 0.0
        %444 = vmatpush1.msra.mxu0 0.0
        %445 = vmatprep.subr.mxu0 0.0
        %446 = vmatpush1.msra.mxu0 0.0
        %447 = vmatprep.subr.mxu0 0.0
        %448 = vmatpush1.msra.mxu0 0.0
        %449 = vmatprep.subr.mxu0 0.0
        %450 = vmatpush1.msra.mxu0 0.0
        %451 = vmatprep.subr.mxu0 0.0
        %452 = vmatpush1.msra.mxu0 0.0
        %453 = vmatprep.subr.mxu0 0.0
        %454 = vmatpush1.msra.mxu0 0.0
        %455 = vmatprep.subr.mxu0 0.0
        %456 = vmatpush1.msra.mxu0 0.0
        %457 = vmatprep.subr.mxu0 0.0
        %458 = vmatpush1.msra.mxu0 0.0
        %459 = vmatprep.subr.mxu0 0.0
        %460 = vmatpush1.msra.mxu0 0.0
        %461 = vmatprep.subr.mxu0 0.0
        %462 = vmatpush1.msra.mxu0 0.0
        %463 = vmatprep.subr.mxu0 0.0
        %464 = vmatpush1.msra.mxu0 0.0
        %465 = vmatprep.subr.mxu0 0.0
        %466 = vmatpush1.msra.mxu0 0.0
        %467 = vmatprep.subr.mxu0 0.0
        %468 = vmatpush1.msra.mxu0 0.0
        %469 = vmatprep.subr.mxu0 0.0
        %470 = vmatpush1.msra.mxu0 0.0
        %471 = vmatprep.subr.mxu0 0.0
        %472 = vmatpush1.msra.mxu0 0.0
        %473 = vmatprep.mubr.f32.mxu0 0.0
        %474 = vmatmul.mubr.f32.gmra.mrb[0].mxu0 %v407
        %v475 = vpop.f32.mrb[0].mxu0
        %v476 = vadd.f32 %v404, %v475
        %v477 = vpop.f32.mrb[0].mxu0
        %478 = vdwg.mxu0
        %vm479 = vcmask 519168
        %v480 = vsel %vm479, %v476, -inf
        %v481 = vrot.slane %v480, 4
        %v482 = vmax.f32 %v480, %v481
        %v483 = vrot.slane %v482, 2
        %v484 = vmax.f32 %v482, %v483
        %v485 = vrot.slane %v484, 1
        %v486 = vmax.f32 %v484, %v485
        %vm487 = vcmp.ge.f32.partialorder %v476, %v486
        %v488 = vsel %vm487, %v353, 4
        %v489 = vsel %vm479, %v488, 2147483647
        %v490 = vrot.slane %v489, 4
        %vm491 = vcmp.lt.s32.totalorder %v489, %v490
        %v492 = vsel %vm491, %v489, %v490
        %v493 = vrot.slane %v492, 2
        %vm494 = vcmp.lt.s32.totalorder %v492, %v493
        %v495 = vsel %vm494, %v492, %v493
        %v496 = vrot.slane %v495, 1
        %vm497 = vcmp.lt.s32.totalorder %v495, %v496
        %v498 = vsel %vm497, %v495, %v496
        %vm499 = vcmp.eq.s32.totalorder %v353, %v498
        %v500 = vsel %vm499, 1, 0
        %v501 = vcvt.s32.f32 %v500
        %v503 = vsel %vm390, 0.015625, 0
        %v506 = vsel %vm390, %v501, 0
        %508 = vmatprep.subr.mxu0 0.0
        %509 = vmatpush1.xpose.msra.mxu0 %v506
        %510 = vmatprep.subr.mxu0 0.0
        %511 = vmatpush1.xpose.msra.mxu0 0.0
        %512 = vmatprep.subr.mxu0 0.0
        %513 = vmatpush1.xpose.msra.mxu0 0.0
        %514 = vmatprep.subr.mxu0 0.0
        %515 = vmatpush1.xpose.msra.mxu0 0.0
        %516 = vmatprep.subr.mxu0 0.0
        %517 = vmatpush1.xpose.msra.mxu0 0.0
        %518 = vmatprep.subr.mxu0 0.0
        %519 = vmatpush1.xpose.msra.mxu0 0.0
        %520 = vmatprep.subr.mxu0 0.0
        %521 = vmatpush1.xpose.msra.mxu0 0.0
        %522 = vmatprep.subr.mxu0 0.0
        %523 = vmatpush1.xpose.msra.mxu0 0.0
        %524 = vmatprep.subr.mxu0 0.0
        %525 = vmatpush1.xpose.msra.mxu0 0.0
        %526 = vmatprep.subr.mxu0 0.0
        %527 = vmatpush1.xpose.msra.mxu0 0.0
        %528 = vmatprep.subr.mxu0 0.0
        %529 = vmatpush1.xpose.msra.mxu0 0.0
        %530 = vmatprep.subr.mxu0 0.0
        %531 = vmatpush1.xpose.msra.mxu0 0.0
        %532 = vmatprep.subr.mxu0 0.0
        %533 = vmatpush1.xpose.msra.mxu0 0.0
        %534 = vmatprep.subr.mxu0 0.0
        %535 = vmatpush1.xpose.msra.mxu0 0.0
        %536 = vmatprep.subr.mxu0 0.0
        %537 = vmatpush1.xpose.msra.mxu0 0.0
        %538 = vmatprep.subr.mxu0 0.0
        %539 = vmatpush1.xpose.msra.mxu0 0.0
        %540 = vmatprep.subr.mxu0 0.0
        %541 = vmatpush1.xpose.msra.mxu0 0.0
        %542 = vmatprep.subr.mxu0 0.0
        %543 = vmatpush1.xpose.msra.mxu0 0.0
        %544 = vmatprep.subr.mxu0 0.0
        %545 = vmatpush1.xpose.msra.mxu0 0.0
        %546 = vmatprep.subr.mxu0 0.0
        %547 = vmatpush1.xpose.msra.mxu0 0.0
        %548 = vmatprep.subr.mxu0 0.0
        %549 = vmatpush1.xpose.msra.mxu0 0.0
        %550 = vmatprep.subr.mxu0 0.0
        %551 = vmatpush1.xpose.msra.mxu0 0.0
        %552 = vmatprep.subr.mxu0 0.0
        %553 = vmatpush1.xpose.msra.mxu0 0.0
        %554 = vmatprep.subr.mxu0 0.0
        %555 = vmatpush1.xpose.msra.mxu0 0.0
        %556 = vmatprep.subr.mxu0 0.0
        %557 = vmatpush1.xpose.msra.mxu0 0.0
        %558 = vmatprep.subr.mxu0 0.0
        %559 = vmatpush1.xpose.msra.mxu0 0.0
        %560 = vmatprep.subr.mxu0 0.0
        %561 = vmatpush1.xpose.msra.mxu0 0.0
        %562 = vmatprep.subr.mxu0 0.0
        %563 = vmatpush1.xpose.msra.mxu0 0.0
        %564 = vmatprep.subr.mxu0 0.0
        %565 = vmatpush1.xpose.msra.mxu0 0.0
        %566 = vmatprep.subr.mxu0 0.0
        %567 = vmatpush1.xpose.msra.mxu0 0.0
        %568 = vmatprep.subr.mxu0 0.0
        %569 = vmatpush1.xpose.msra.mxu0 0.0
        %570 = vmatprep.subr.mxu0 0.0
        %571 = vmatpush1.xpose.msra.mxu0 0.0
        %572 = vmatprep.mubr.f32.mxu0 0.0
        %573 = vmatmul.mubr.f32.gmra.mrb[0].mxu0 %v503
        %v574 = vpop.f32.mrb[0].mxu0
        %v575 = vadd.f32 0.0, %v574
        %v576 = vpop.f32.mrb[0].mxu0
        %577 = vdwg.mxu0
        %579 = vset.pattern.permute.xlu0 0
        %580 = vperm.xlu0 %579, %v349
        %v581 = vpop.permute.xlu0 %580
        %v583 = vadd.f32 %v581, %v363
        %v584 = vand.u32 2147483647, %v583
        %v585 = vrcp.pop 1.0
        %v586 = vmul.f32 %v584, %v585
        %v587 = vfloor.f32 %v586
        %v588 = vsub.f32 %v584, %v587
        %vm589 = vcmp.eq.f32.partialorder %v588, 1.0
        %v590 = vsel %vm589, 0.0, %v588
        %v591 = vand.u32 2147483647, %v590
        %v592 = vand.u32 %v583, 2147483648
        %v593 = vor.u32 %v591, %v592
        %vm594 = vcmp.ne.f32.partialorder %v593, 0.0
        %vm595 = vcmp.lt.f32.partialorder %v593, 0.0
        %vm596 = vmand %vm595, %vm594
        %v597 = vadd.f32 %v593, 1.0
        %v598 = vsel %vm596, %v597, %v593
        %vm599 = vcmp.lt.f32.partialorder %v598, 0.25
        %v600 = vsel %vm599, 1, 0
        %v601 = vcvt.s32.f32 %v600
        %603 = vset.pattern.permute.xlu0 0
        %604 = vperm.xlu0 %603, %v351
        %v605 = vpop.permute.xlu0 %604
        %v607 = vmul.f32 %v605, %v601
        %v608 = vsel %vm390, %v607, 0.0
        %v609 = vrot.slane %v608, 4
        %v610 = vadd.f32 %v608, %v609
        %v611 = vrot.slane %v610, 2
        %v612 = vadd.f32 %v610, %v611
        %v613 = vrot.slane %v612, 1
        %v614 = vadd.f32 %v612, %v613
        %v615 = vmax.f32 %v614, 1.0
        %v616 = vmul.f32 %v402, %v615
        %617 = vrot.lane.b32.xlu0 %v341, 120
        %v618 = vpop.permute.xlu0 %617
        %v619 = vsel %vm405, %v618, 0
        %621 = vmatprep.subr.mxu0 0.0
        %622 = vmatpush1.msra.mxu0 %v607
        %623 = vmatprep.subr.mxu0 0.0
        %624 = vmatpush1.msra.mxu0 0.0
        %625 = vmatprep.subr.mxu0 0.0
        %626 = vmatpush1.msra.mxu0 0.0
        %627 = vmatprep.subr.mxu0 0.0
        %628 = vmatpush1.msra.mxu0 0.0
        %629 = vmatprep.subr.mxu0 0.0
        %630 = vmatpush1.msra.mxu0 0.0
        %631 = vmatprep.subr.mxu0 0.0
        %632 = vmatpush1.msra.mxu0 0.0
        %633 = vmatprep.subr.mxu0 0.0
        %634 = vmatpush1.msra.mxu0 0.0
        %635 = vmatprep.subr.mxu0 0.0
        %636 = vmatpush1.msra.mxu0 0.0
        %637 = vmatprep.subr.mxu0 0.0
        %638 = vmatpush1.msra.mxu0 0.0
        %639 = vmatprep.subr.mxu0 0.0
        %640 = vmatpush1.msra.mxu0 0.0
        %641 = vmatprep.subr.mxu0 0.0
        %642 = vmatpush1.msra.mxu0 0.0
        %643 = vmatprep.subr.mxu0 0.0
        %644 = vmatpush1.msra.mxu0 0.0
        %645 = vmatprep.subr.mxu0 0.0
        %646 = vmatpush1.msra.mxu0 0.0
        %647 = vmatprep.subr.mxu0 0.0
        %648 = vmatpush1.msra.mxu0 0.0
        %649 = vmatprep.subr.mxu0 0.0
        %650 = vmatpush1.msra.mxu0 0.0
        %651 = vmatprep.subr.mxu0 0.0
        %652 = vmatpush1.msra.mxu0 0.0
        %653 = vmatprep.subr.mxu0 0.0
        %654 = vmatpush1.msra.mxu0 0.0
        %655 = vmatprep.subr.mxu0 0.0
        %656 = vmatpush1.msra.mxu0 0.0
        %657 = vmatprep.subr.mxu0 0.0
        %658 = vmatpush1.msra.mxu0 0.0
        %659 = vmatprep.subr.mxu0 0.0
        %660 = vmatpush1.msra.mxu0 0.0
        %661 = vmatprep.subr.mxu0 0.0
        %662 = vmatpush1.msra.mxu0 0.0
        %663 = vmatprep.subr.mxu0 0.0
        %664 = vmatpush1.msra.mxu0 0.0
        %665 = vmatprep.subr.mxu0 0.0
        %666 = vmatpush1.msra.mxu0 0.0
        %667 = vmatprep.subr.mxu0 0.0
        %668 = vmatpush1.msra.mxu0 0.0
        %669 = vmatprep.subr.mxu0 0.0
        %670 = vmatpush1.msra.mxu0 0.0
        %671 = vmatprep.subr.mxu0 0.0
        %672 = vmatpush1.msra.mxu0 0.0
        %673 = vmatprep.subr.mxu0 0.0
        %674 = vmatpush1.msra.mxu0 0.0
        %675 = vmatprep.subr.mxu0 0.0
        %676 = vmatpush1.msra.mxu0 0.0
        %677 = vmatprep.subr.mxu0 0.0
        %678 = vmatpush1.msra.mxu0 0.0
        %679 = vmatprep.subr.mxu0 0.0
        %680 = vmatpush1.msra.mxu0 0.0
        %681 = vmatprep.subr.mxu0 0.0
        %682 = vmatpush1.msra.mxu0 0.0
        %683 = vmatprep.subr.mxu0 0.0
        %684 = vmatpush1.msra.mxu0 0.0
        %685 = vmatprep.mubr.f32.mxu0 0.0
        %686 = vmatmul.mubr.f32.gmra.mrb[0].mxu0 %v619
        %v687 = vpop.f32.mrb[0].mxu0
        %v688 = vadd.f32 %v616, %v687
        %v689 = vpop.f32.mrb[0].mxu0
        %690 = vdwg.mxu0
        %v691 = vsel %vm479, %v688, -inf
        %v692 = vrot.slane %v691, 4
        %v693 = vmax.f32 %v691, %v692
        %v694 = vrot.slane %v693, 2
        %v695 = vmax.f32 %v693, %v694
        %v696 = vrot.slane %v695, 1
        %v697 = vmax.f32 %v695, %v696
        %vm698 = vcmp.ge.f32.partialorder %v688, %v697
        %v699 = vsel %vm698, %v353, 4
        %v700 = vsel %vm479, %v699, 2147483647
        %v701 = vrot.slane %v700, 4
        %vm702 = vcmp.lt.s32.totalorder %v700, %v701
        %v703 = vsel %vm702, %v700, %v701
        %v704 = vrot.slane %v703, 2
        %vm705 = vcmp.lt.s32.totalorder %v703, %v704
        %v706 = vsel %vm705, %v703, %v704
        %v707 = vrot.slane %v706, 1
        %vm708 = vcmp.lt.s32.totalorder %v706, %v707
        %v709 = vsel %vm708, %v706, %v707
        %vm710 = vcmp.eq.s32.totalorder %v353, %v709
        %v711 = vsel %vm710, 1, 0
        %v712 = vcvt.s32.f32 %v711
        %v714 = vsel %vm390, %v712, 0
        %716 = vmatprep.subr.mxu0 0.0
        %717 = vmatpush1.xpose.msra.mxu0 %v714
        %718 = vmatprep.subr.mxu0 0.0
        %719 = vmatpush1.xpose.msra.mxu0 0.0
        %720 = vmatprep.subr.mxu0 0.0
        %721 = vmatpush1.xpose.msra.mxu0 0.0
        %722 = vmatprep.subr.mxu0 0.0
        %723 = vmatpush1.xpose.msra.mxu0 0.0
        %724 = vmatprep.subr.mxu0 0.0
        %725 = vmatpush1.xpose.msra.mxu0 0.0
        %726 = vmatprep.subr.mxu0 0.0
        %727 = vmatpush1.xpose.msra.mxu0 0.0
        %728 = vmatprep.subr.mxu0 0.0
        %729 = vmatpush1.xpose.msra.mxu0 0.0
        %730 = vmatprep.subr.mxu0 0.0
        %731 = vmatpush1.xpose.msra.mxu0 0.0
        %732 = vmatprep.subr.mxu0 0.0
        %733 = vmatpush1.xpose.msra.mxu0 0.0
        %734 = vmatprep.subr.mxu0 0.0
        %735 = vmatpush1.xpose.msra.mxu0 0.0
        %736 = vmatprep.subr.mxu0 0.0
        %737 = vmatpush1.xpose.msra.mxu0 0.0
        %738 = vmatprep.subr.mxu0 0.0
        %739 = vmatpush1.xpose.msra.mxu0 0.0
        %740 = vmatprep.subr.mxu0 0.0
        %741 = vmatpush1.xpose.msra.mxu0 0.0
        %742 = vmatprep.subr.mxu0 0.0
        %743 = vmatpush1.xpose.msra.mxu0 0.0
        %744 = vmatprep.subr.mxu0 0.0
        %745 = vmatpush1.xpose.msra.mxu0 0.0
        %746 = vmatprep.subr.mxu0 0.0
        %747 = vmatpush1.xpose.msra.mxu0 0.0
        %748 = vmatprep.subr.mxu0 0.0
        %749 = vmatpush1.xpose.msra.mxu0 0.0
        %750 = vmatprep.subr.mxu0 0.0
        %751 = vmatpush1.xpose.msra.mxu0 0.0
        %752 = vmatprep.subr.mxu0 0.0
        %753 = vmatpush1.xpose.msra.mxu0 0.0
        %754 = vmatprep.subr.mxu0 0.0
        %755 = vmatpush1.xpose.msra.mxu0 0.0
        %756 = vmatprep.subr.mxu0 0.0
        %757 = vmatpush1.xpose.msra.mxu0 0.0
        %758 = vmatprep.subr.mxu0 0.0
        %759 = vmatpush1.xpose.msra.mxu0 0.0
        %760 = vmatprep.subr.mxu0 0.0
        %761 = vmatpush1.xpose.msra.mxu0 0.0
        %762 = vmatprep.subr.mxu0 0.0
        %763 = vmatpush1.xpose.msra.mxu0 0.0
        %764 = vmatprep.subr.mxu0 0.0
        %765 = vmatpush1.xpose.msra.mxu0 0.0
        %766 = vmatprep.subr.mxu0 0.0
        %767 = vmatpush1.xpose.msra.mxu0 0.0
        %768 = vmatprep.subr.mxu0 0.0
        %769 = vmatpush1.xpose.msra.mxu0 0.0
        %770 = vmatprep.subr.mxu0 0.0
        %771 = vmatpush1.xpose.msra.mxu0 0.0
        %772 = vmatprep.subr.mxu0 0.0
        %773 = vmatpush1.xpose.msra.mxu0 0.0
        %774 = vmatprep.subr.mxu0 0.0
        %775 = vmatpush1.xpose.msra.mxu0 0.0
        %776 = vmatprep.subr.mxu0 0.0
        %777 = vmatpush1.xpose.msra.mxu0 0.0
        %778 = vmatprep.subr.mxu0 0.0
        %779 = vmatpush1.xpose.msra.mxu0 0.0
        %780 = vmatprep.mubr.f32.mxu0 0.0
        %781 = vmatmul.mubr.f32.gmra.mrb[0].mxu0 %v503
        %v782 = vpop.f32.mrb[0].mxu0
        %v783 = vadd.f32 0.0, %v782
        %v784 = vpop.f32.mrb[0].mxu0
        %785 = vdwg.mxu0
        %v787 = vrot.slane %v783, 7
        %vm789 = vcmask 1040384
        %v790 = vsel %vm789, %v575, %v787
        %vm791 = vcmask 25600
        %792 = vst.msk [vmem:[%s274] sm:$0x3] %vm791, %v790
        %s793 = sand.u32 %s169, 1
        %s794 = scalar_lea.sflag [#allocation3], %s793
        %s795 = sand.u32 %s169, 1
        %s796 = smul.addr %s795, 2
        %s797 = scalar_lea.vmem [#allocation2], %s796
        // Predicated region
        $region45: #{tpu_custom_call.1} parent=43 // pred_check
          %p798 = pneg %p179
        $region46: #{tpu_custom_call.1} parent=43 // pred_check_branch
          %800 = sbr.rel (%p798) target = $region48
        $region47: #{tpu_custom_call.1} parent=43 // pred_region
          %s802 = ssub.s32 32, 32
          %803 = vsyncadd %s794, %s802
          %s804 = smul.addr %s20, 32
          %s805 = scalar_lea.hbm %s6, %s804
          %s807 = sshll.u32 %s797, 4
          %s808 = int_to_ptr.vmem [resolvable:$true] %s807
          %810 = dma.vmem_to_hbm [thread:$0]  %s808, 32, %s805, %s794
        $region48: #{tpu_custom_call.1} parent=43 // pred_fallthru
          _
      $region44: #{tpu_custom_call.1} parent=5 // pred_fallthru
        _
      %p811 = scmp.le.s32.totalorder 2, %s15
      // Predicated region
      $region49: #{tpu_custom_call.1} parent=5 // pred_check
        %p812 = pneg %p811
      $region50: #{tpu_custom_call.1} parent=5 // pred_check_branch
        %814 = sbr.rel (%p812) target = $region52
      $region51: #{tpu_custom_call.1} parent=5 // pred_region
        %s815 = ssub.s32 %s15, 2
        // Predicated region
        $region53: #{tpu_custom_call.1} parent=51 // pred_check
          %p816 = pneg %p185
        $region54: #{tpu_custom_call.1} parent=51 // pred_check_branch
          %818 = sbr.rel (%p816) target = $region56
        $region55: #{tpu_custom_call.1} parent=51 // pred_region
          %s819 = sand.u32 %s170, 1
          %s820 = scalar_lea.sflag [#allocation3], %s819
          %s821 = sand.u32 %s170, 1
          %s822 = smul.addr %s821, 2
          %s823 = scalar_lea.vmem [#allocation2], %s822
          %824 = dma.done %s820, 32
        $region56: #{tpu_custom_call.1} parent=51 // pred_fallthru
          _
      $region52: #{tpu_custom_call.1} parent=5 // pred_fallthru
        _
    $region6: #{tpu_custom_call.1} parent=1 // loop_footer
      %s19 = sadd.s32 1, %s15
    $region7: #{tpu_custom_call.1} parent=1 // loop_footer_branch
      %14 = sbr.rel target = $region3
    $region8: #{tpu_custom_call.1} parent=1 // loop_exit
      _
    %825 = vsyncpa [#allocation3], 1
    %s826 = scalar_lea.sflag [#allocation3], 1
    %827 = vsyncpa %s826, 1

</llo_original>
